<compile_context>
chip_gen: v5e
topology: v5e:2x2
jax: 0.10.0
libtpu: 0.0.40
codegen_flags: <defaults>
</compile_context>

<pallas_src>
import jax
import jax.numpy as jnp
from jax.experimental import pallas as pl
from jax.experimental.pallas import tpu as pltpu

HIDDEN = 64          # LSTM hidden size (bidirectional -> 128 features)
LEAKY_SLOPE = 0.2
BN_EPS = 1e-5
LANE = 128           # TPU lane width; all feature dims padded to a multiple of this


def _round_up(n, m=LANE):
    return ((n + m - 1) // m) * m


def _sigmoid(x):
    # tanh identity: a single EUP push per call (vs exp + reciprocal).
    return 0.5 * jnp.tanh(0.5 * x) + 0.5


def _make_kernel(n_hidden, residual_flags):
    residual_flags = tuple(residual_flags)

    def kernel(*refs):
        out_ref = refs[-1]
        it = iter(refs[:-1])
        x = next(it)[...]                                  # (B, input_dim) bf16

        # ---- fused bidirectional LSTM step (seq_len == 1, h0 = c0 = 0) ----
        # Gate columns packed host-side as [i_f|i_b | g_f|g_b | o_f|o_b];
        # each group is 2*HIDDEN = 128 lanes. Forget gate dropped (f * c0 == 0).
        w_ref, b_ref = next(it), next(it)
        g = jnp.dot(x, w_ref[...], preferred_element_type=jnp.float32) + b_ref[...]
        i = _sigmoid(g[:, 0 * 2 * HIDDEN:1 * 2 * HIDDEN])
        gg = jnp.tanh(g[:, 1 * 2 * HIDDEN:2 * 2 * HIDDEN])
        o = _sigmoid(g[:, 2 * 2 * HIDDEN:3 * 2 * HIDDEN])
        h = o * jnp.tanh(i * gg)                           # (B, 128) = [h_fwd | h_bwd]

        # ---- MLP stack: Linear -> LeakyReLU(0.2) -> BatchNorm1d (+ Residual) ----
        for li in range(n_hidden):
            w_ref, b_ref, gam_ref, beta_ref = next(it), next(it), next(it), next(it)
            z = jnp.dot(h.astype(jnp.bfloat16), w_ref[...],
                        preferred_element_type=jnp.float32) + b_ref[...]
            a = jnp.maximum(z, LEAKY_SLOPE * z)            # LeakyReLU(0.2)
            mean = jnp.mean(a, axis=0, keepdims=True)      # (1, 128)
            d = a - mean                                   # only for the variance
            var = jnp.mean(d * d, axis=0, keepdims=True)   # biased (training mode)
            # fold BN affine onto (1,128) vectors: one (B,128) mul + add total
            scale = gam_ref[...] * jax.lax.rsqrt(var + BN_EPS)
            shift = beta_ref[...] - scale * mean
            h = a * scale + shift
            if residual_flags[li]:
                wr_ref, br_ref = next(it), next(it)
                h = h + (jnp.dot(h.astype(jnp.bfloat16), wr_ref[...],
                                 preferred_element_type=jnp.float32) + br_ref[...])

        # ---- final Linear + Tanh (lane-dense padded bf16 output, sliced in wrapper) ----
        wf_ref, bf_ref = next(it), next(it)
        out = jnp.tanh(jnp.dot(h.astype(jnp.bfloat16), wf_ref[...],
                               preferred_element_type=jnp.float32) + bf_ref[...])
        out_ref[...] = out.astype(out_ref.dtype)

    return kernel


def _vmem_limit_bytes(batch, packed):
    """Scoped-VMEM budget sized from batch + param bytes, clamped to the
    physical VMEM of the running TPU generation (v7x = 64 MiB worst case)."""
    param_bytes = sum(int(a.size) * a.dtype.itemsize for a in packed)
    # peak live f32 activations: (B,384) gate pre-acts + ~8 (B,128) temps,
    # plus bf16 matmul inputs and the bf16 padded output; x2 for Mosaic temps.
    act_bytes = batch * (384 * 4 + 8 * 128 * 4 + 4 * 128 * 2)
    est = 2 * param_bytes + 2 * act_bytes + (2 << 20)
    try:
        hw_cap = int(pltpu.get_tpu_info().vmem_capacity_bytes)
    except Exception:
        hw_cap = 64 << 20                    # v7x: most restrictive generation
    ceiling = hw_cap - (8 << 20)             # headroom for Mosaic internals
    if est > ceiling:
        raise ValueError(
            "batch=%d needs ~%d MiB VMEM but only ~%d MiB is usable on this "
            "TPU; use a batch-tiled two-pass BatchNorm path for batches this "
            "large." % (batch, est >> 20, ceiling >> 20))
    return int(min(max(est, 16 << 20), ceiling))


def generator_forward(noise, packed_params, gen_layers, output_dim, residual_flags):
    """Run the fused generator forward. `packed_params` from pack_params()."""
    B = noise.shape[0]
    out_pad = _round_up(output_dim)
    kernel = _make_kernel(len(gen_layers), residual_flags)
    vmem = pl.BlockSpec(memory_space=pltpu.MemorySpace.VMEM)
    inputs = [noise.astype(jnp.bfloat16)] + list(packed_params)
    out = pl.pallas_call(
        kernel,
        out_shape=jax.ShapeDtypeStruct((B, out_pad), jnp.bfloat16),
        in_specs=[vmem] * len(inputs),
        out_specs=vmem,
        compiler_params=pltpu.CompilerParams(
            vmem_limit_bytes=_vmem_limit_bytes(B, inputs)),
    )(*inputs)
    return out[:, :output_dim].astype(jnp.float32)


# ----------------------------------------------------------------------------
# Parameter construction: PyTorch-layout synthetic params + packing to the
# fused / lane-padded kernel layout (weights bf16, per-lane vectors f32).
# ----------------------------------------------------------------------------
def init_torch_style_params(key, input_dim, gen_layers, output_dim):
    residual_flags = [i > 1 and gen_layers[i] == gen_layers[i - 2]
                      for i in range(len(gen_layers))]
    keys = iter(jax.random.split(key, 64))

    def dense(shape, scale=0.1):
        return jax.random.normal(next(keys), shape, jnp.float32) * scale

    p = {}
    # biLSTM, PyTorch layout: weight_ih (4H, in), bias_ih (4H,), bias_hh (4H,)
    for dname in ("fwd", "bwd"):
        p[f"lstm_w_ih_{dname}"] = dense((4 * HIDDEN, input_dim))
        p[f"lstm_b_ih_{dname}"] = dense((4 * HIDDEN,))
        p[f"lstm_b_hh_{dname}"] = dense((4 * HIDDEN,))
    layers = []
    d_in = 2 * HIDDEN
    for li, d_out in enumerate(gen_layers):
        lp = {"w": dense((d_out, d_in)),                   # nn.Linear weight (out, in)
              "b": dense((d_out,)),
              "gamma": jnp.ones((d_out,), jnp.float32),    # BatchNorm1d init
              "beta": jnp.zeros((d_out,), jnp.float32)}
        if residual_flags[li]:
            lp["wr"] = dense((d_out, d_out))
            lp["br"] = dense((d_out,))
        layers.append(lp)
        d_in = d_out
    p["layers"] = layers
    p["w_out"] = dense((output_dim, d_in))
    p["b_out"] = dense((output_dim,))
    return p, residual_flags


def pack_params(p, gen_layers, output_dim, residual_flags):
    """PyTorch-layout f32 params -> fused / 128-lane-padded kernel layout.
    Matmul weights -> bf16 (MXU path, half the DMA); (1,*) lane vectors
    (biases, gamma, beta) stay f32 (negligible DMA, no round-trip drift)."""
    def pad2(a, rows, cols):
        return jnp.zeros((rows, cols), a.dtype).at[:a.shape[0], :a.shape[1]].set(a)

    bf = lambda a: a.astype(jnp.bfloat16)
    packed = []

    # Fused biLSTM gate matmul: drop the forget gate, interleave directions so
    # each nonlinearity group spans a full 128-lane vreg: [i_f|i_b, g_f|g_b, o_f|o_b].
    def gates(w_ih, b_ih, b_hh):
        wt = w_ih.T                                        # (in, 4H); PyTorch order i,f,g,o
        b = (b_ih + b_hh)[None, :]                         # (1, 4H)
        sl = lambda a, k: a[:, k * HIDDEN:(k + 1) * HIDDEN]
        return (sl(wt, 0), sl(wt, 2), sl(wt, 3)), (sl(b, 0), sl(b, 2), sl(b, 3))

    (wi_f, wg_f, wo_f), (bi_f, bg_f, bo_f) = gates(
        p["lstm_w_ih_fwd"], p["lstm_b_ih_fwd"], p["lstm_b_hh_fwd"])
    (wi_b, wg_b, wo_b), (bi_b, bg_b, bo_b) = gates(
        p["lstm_w_ih_bwd"], p["lstm_b_ih_bwd"], p["lstm_b_hh_bwd"])
    packed.append(bf(jnp.concatenate([wi_f, wi_b, wg_f, wg_b, wo_f, wo_b], axis=1)))
    packed.append(jnp.concatenate([bi_f, bi_b, bg_f, bg_b, bo_f, bo_b], axis=1))  # f32

    d_in = 2 * HIDDEN
    for li, d_out in enumerate(gen_layers):
        d_in_p, d_out_p = _round_up(d_in), _round_up(d_out)
        lp = p["layers"][li]
        packed.append(bf(pad2(lp["w"].T, d_in_p, d_out_p)))      # (in_p, out_p) bf16
        packed.append(pad2(lp["b"][None, :], 1, d_out_p))        # f32
        packed.append(pad2(lp["gamma"][None, :], 1, d_out_p))    # f32
        packed.append(pad2(lp["beta"][None, :], 1, d_out_p))     # f32
        if residual_flags[li]:
            packed.append(bf(pad2(lp["wr"].T, d_out_p, d_out_p)))
            packed.append(pad2(lp["br"][None, :], 1, d_out_p))   # f32
        d_in = d_out
    packed.append(bf(pad2(p["w_out"].T, _round_up(d_in), _round_up(output_dim))))
    packed.append(pad2(p["b_out"][None, :], 1, _round_up(output_dim)))           # f32
    return packed


# ----------------------------------------------------------------------------
# Plain-JAX reference: full PyTorch semantics (4-gate biLSTM, unpadded widths),
# with the kernel's precision policy (bf16 matmul inputs/weights, bf16 output
# store) applied so the comparison is tight.
# ----------------------------------------------------------------------------
def reference_forward(noise, p, gen_layers, residual_flags):
    r = lambda a: a.astype(jnp.bfloat16).astype(jnp.float32)   # bf16 rounding
    x = r(noise)

    def lstm_dir(name):
        w = r(p[f"lstm_w_ih_{name}"])
        b = p[f"lstm_b_ih_{name}"] + p[f"lstm_b_hh_{name}"]
        g = x @ w.T + b
        i = 1.0 / (1.0 + jnp.exp(-g[:, 0 * HIDDEN:1 * HIDDEN]))
        # forget gate: f * c0 == 0, omitted (mathematically identical)
        gg = jnp.tanh(g[:, 2 * HIDDEN:3 * HIDDEN])
        o = 1.0 / (1.0 + jnp.exp(-g[:, 3 * HIDDEN:4 * HIDDEN]))
        return o * jnp.tanh(i * gg)

    h = jnp.concatenate([lstm_dir("fwd"), lstm_dir("bwd")], axis=-1)
    for li, lp in enumerate(p["layers"]):
        z = r(h) @ r(lp["w"]).T + lp["b"]
        a = jnp.where(z > 0, z, LEAKY_SLOPE * z)
        mean = jnp.mean(a, axis=0, keepdims=True)
        d = a - mean
        var = jnp.mean(d * d, axis=0, keepdims=True)            # biased, training mode
        h = lp["gamma"] * d * jax.lax.rsqrt(var + BN_EPS) + lp["beta"]
        if residual_flags[li]:
            h = h + (r(h) @ r(lp["wr"]).T + lp["br"])
    out = jnp.tanh(r(h) @ r(p["w_out"]).T + p["b_out"])
    return r(out)                                               # kernel stores bf16


if __name__ == "__main__":
    # Small config consistent with the module: noise -> biLSTM(64, bidirectional)
    # -> generator_layers with a residual trigger (layer 2 == layer 0) -> output.
    B = 8
    INPUT_DIM = 16
    GEN_LAYERS = [32, 32, 32]     # i=2: 32 == 32 -> Residual block exercised
    OUTPUT_DIM = 8

    key = jax.random.PRNGKey(0)
    pkey, nkey = jax.random.split(key)
    torch_params, residual_flags = init_torch_style_params(
        pkey, INPUT_DIM, GEN_LAYERS, OUTPUT_DIM)
    packed = pack_params(torch_params, GEN_LAYERS, OUTPUT_DIM, residual_flags)
    noise = jax.random.normal(nkey, (B, INPUT_DIM), jnp.float32)

    out = generator_forward(noise, packed, GEN_LAYERS, OUTPUT_DIM, residual_flags)
    out = jax.block_until_ready(out)

    ref = reference_forward(noise, torch_params, GEN_LAYERS, residual_flags)
    assert out.shape == (B, OUTPUT_DIM)
    max_diff = float(jnp.max(jnp.abs(out - ref)))
    # Tolerance covers MXU-vs-XLA accumulation-order differences with bf16
    # matmul inputs plus the bf16 output store (exact sigmoid/BN everywhere).
    assert bool(jnp.allclose(out, ref, atol=1e-2, rtol=1e-2)), (
        "mismatch vs JAX reference: max |diff| = %g" % max_diff)
    print("KERNEL_OK")
</pallas_src>

<mosaic_0001>
module attributes {stable_mosaic.version = 11 : i64} {
  func.func @kernel(%arg0: memref<8x16xbf16, #tpu.memory_space<vmem>>, %arg1: memref<16x384xbf16, #tpu.memory_space<vmem>>, %arg2: memref<1x384xf32, #tpu.memory_space<vmem>>, %arg3: memref<128x128xbf16, #tpu.memory_space<vmem>>, %arg4: memref<1x128xf32, #tpu.memory_space<vmem>>, %arg5: memref<1x128xf32, #tpu.memory_space<vmem>>, %arg6: memref<1x128xf32, #tpu.memory_space<vmem>>, %arg7: memref<128x128xbf16, #tpu.memory_space<vmem>>, %arg8: memref<1x128xf32, #tpu.memory_space<vmem>>, %arg9: memref<1x128xf32, #tpu.memory_space<vmem>>, %arg10: memref<1x128xf32, #tpu.memory_space<vmem>>, %arg11: memref<128x128xbf16, #tpu.memory_space<vmem>>, %arg12: memref<1x128xf32, #tpu.memory_space<vmem>>, %arg13: memref<1x128xf32, #tpu.memory_space<vmem>>, %arg14: memref<1x128xf32, #tpu.memory_space<vmem>>, %arg15: memref<128x128xbf16, #tpu.memory_space<vmem>>, %arg16: memref<1x128xf32, #tpu.memory_space<vmem>>, %arg17: memref<128x128xbf16, #tpu.memory_space<vmem>>, %arg18: memref<1x128xf32, #tpu.memory_space<vmem>>, %arg19: memref<8x128xbf16, #tpu.memory_space<vmem>>) attributes {dimension_semantics = [], scalar_prefetch = 0 : i64, scratch_operands = 0 : i64, tpu.core_type = #tpu.core_type<tc>} {
    %c0 = arith.constant 0 : index
    %c0_0 = arith.constant 0 : index
    %0 = vector.load %arg0[%c0, %c0_0] : memref<8x16xbf16, #tpu.memory_space<vmem>>, vector<8x16xbf16>
    %c0_1 = arith.constant 0 : index
    %c0_2 = arith.constant 0 : index
    %1 = vector.load %arg1[%c0_1, %c0_2] : memref<16x384xbf16, #tpu.memory_space<vmem>>, vector<16x384xbf16>
    %cst = arith.constant dense<0.000000e+00> : vector<8x384xf32>
    %2 = tpu.matmul %0, %1, %cst {dimension_numbers = #tpu.dot_dimension_numbers<[1], [0], [0], [1], [0, 0, 1, 1], [], []>} : vector<8x16xbf16>, vector<16x384xbf16>, vector<8x384xf32> -> vector<8x384xf32>
    %c0_3 = arith.constant 0 : index
    %c0_4 = arith.constant 0 : index
    %3 = vector.load %arg2[%c0_3, %c0_4] : memref<1x384xf32, #tpu.memory_space<vmem>>, vector<1x384xf32>
    %4 = vector.broadcast %3 : vector<1x384xf32> to vector<8x384xf32>
    %5 = arith.addf %2, %4 : vector<8x384xf32>
    %6 = vector.extract_strided_slice %5 {offsets = [0, 0], sizes = [8, 128], strides = [1, 1]} : vector<8x384xf32> to vector<8x128xf32>
    %cst_5 = arith.constant 5.000000e-01 : f32
    %7 = vector.broadcast %cst_5 : f32 to vector<8x128xf32>
    %8 = arith.mulf %7, %6 : vector<8x128xf32>
    %9 = math.tanh %8 : vector<8x128xf32>
    %cst_6 = arith.constant 5.000000e-01 : f32
    %10 = vector.broadcast %cst_6 : f32 to vector<8x128xf32>
    %11 = arith.mulf %10, %9 : vector<8x128xf32>
    %cst_7 = arith.constant 5.000000e-01 : f32
    %12 = vector.broadcast %cst_7 : f32 to vector<8x128xf32>
    %13 = arith.addf %11, %12 : vector<8x128xf32>
    %14 = vector.extract_strided_slice %5 {offsets = [0, 128], sizes = [8, 128], strides = [1, 1]} : vector<8x384xf32> to vector<8x128xf32>
    %15 = math.tanh %14 : vector<8x128xf32>
    %16 = vector.extract_strided_slice %5 {offsets = [0, 256], sizes = [8, 128], strides = [1, 1]} : vector<8x384xf32> to vector<8x128xf32>
    %cst_8 = arith.constant 5.000000e-01 : f32
    %17 = vector.broadcast %cst_8 : f32 to vector<8x128xf32>
    %18 = arith.mulf %17, %16 : vector<8x128xf32>
    %19 = math.tanh %18 : vector<8x128xf32>
    %cst_9 = arith.constant 5.000000e-01 : f32
    %20 = vector.broadcast %cst_9 : f32 to vector<8x128xf32>
    %21 = arith.mulf %20, %19 : vector<8x128xf32>
    %cst_10 = arith.constant 5.000000e-01 : f32
    %22 = vector.broadcast %cst_10 : f32 to vector<8x128xf32>
    %23 = arith.addf %21, %22 : vector<8x128xf32>
    %24 = arith.mulf %13, %15 : vector<8x128xf32>
    %25 = math.tanh %24 : vector<8x128xf32>
    %26 = arith.mulf %23, %25 : vector<8x128xf32>
    %27 = arith.truncf %26 : vector<8x128xf32> to vector<8x128xbf16>
    %c0_11 = arith.constant 0 : index
    %c0_12 = arith.constant 0 : index
    %28 = vector.load %arg3[%c0_11, %c0_12] : memref<128x128xbf16, #tpu.memory_space<vmem>>, vector<128x128xbf16>
    %cst_13 = arith.constant dense<0.000000e+00> : vector<8x128xf32>
    %29 = tpu.matmul %27, %28, %cst_13 {dimension_numbers = #tpu.dot_dimension_numbers<[1], [0], [0], [1], [0, 0, 1, 1], [], []>} : vector<8x128xbf16>, vector<128x128xbf16>, vector<8x128xf32> -> vector<8x128xf32>
    %c0_14 = arith.constant 0 : index
    %c0_15 = arith.constant 0 : index
    %30 = vector.load %arg4[%c0_14, %c0_15] : memref<1x128xf32, #tpu.memory_space<vmem>>, vector<1x128xf32>
    %31 = vector.broadcast %30 : vector<1x128xf32> to vector<8x128xf32>
    %32 = arith.addf %29, %31 : vector<8x128xf32>
    %cst_16 = arith.constant 2.000000e-01 : f32
    %33 = vector.broadcast %cst_16 : f32 to vector<8x128xf32>
    %34 = arith.mulf %33, %32 : vector<8x128xf32>
    %35 = arith.maximumf %32, %34 : vector<8x128xf32>
    %cst_17 = arith.constant dense<0.000000e+00> : vector<128xf32>
    %36 = vector.multi_reduction <add>, %35, %cst_17 [0] : vector<8x128xf32> to vector<128xf32>
    %37 = vector.shape_cast %36 : vector<128xf32> to vector<1x128xf32>
    %cst_18 = arith.constant 8.000000e+00 : f32
    %38 = vector.broadcast %cst_18 : f32 to vector<1x128xf32>
    %39 = arith.divf %37, %38 : vector<1x128xf32>
    %40 = vector.broadcast %39 : vector<1x128xf32> to vector<8x128xf32>
    %41 = arith.subf %35, %40 : vector<8x128xf32>
    %42 = arith.mulf %41, %41 : vector<8x128xf32>
    %cst_19 = arith.constant dense<0.000000e+00> : vector<128xf32>
    %43 = vector.multi_reduction <add>, %42, %cst_19 [0] : vector<8x128xf32> to vector<128xf32>
    %44 = vector.shape_cast %43 : vector<128xf32> to vector<1x128xf32>
    %cst_20 = arith.constant 8.000000e+00 : f32
    %45 = vector.broadcast %cst_20 : f32 to vector<1x128xf32>
    %46 = arith.divf %44, %45 : vector<1x128xf32>
    %c0_21 = arith.constant 0 : index
    %c0_22 = arith.constant 0 : index
    %47 = vector.load %arg5[%c0_21, %c0_22] : memref<1x128xf32, #tpu.memory_space<vmem>>, vector<1x128xf32>
    %cst_23 = arith.constant 9.99999974E-6 : f32
    %48 = vector.broadcast %cst_23 : f32 to vector<1x128xf32>
    %49 = arith.addf %46, %48 : vector<1x128xf32>
    %50 = math.rsqrt %49 : vector<1x128xf32>
    %51 = arith.mulf %47, %50 : vector<1x128xf32>
    %c0_24 = arith.constant 0 : index
    %c0_25 = arith.constant 0 : index
    %52 = vector.load %arg6[%c0_24, %c0_25] : memref<1x128xf32, #tpu.memory_space<vmem>>, vector<1x128xf32>
    %53 = arith.mulf %51, %39 : vector<1x128xf32>
    %54 = arith.subf %52, %53 : vector<1x128xf32>
    %55 = vector.broadcast %51 : vector<1x128xf32> to vector<8x128xf32>
    %56 = arith.mulf %35, %55 : vector<8x128xf32>
    %57 = vector.broadcast %54 : vector<1x128xf32> to vector<8x128xf32>
    %58 = arith.addf %56, %57 : vector<8x128xf32>
    %59 = arith.truncf %58 : vector<8x128xf32> to vector<8x128xbf16>
    %c0_26 = arith.constant 0 : index
    %c0_27 = arith.constant 0 : index
    %60 = vector.load %arg7[%c0_26, %c0_27] : memref<128x128xbf16, #tpu.memory_space<vmem>>, vector<128x128xbf16>
    %cst_28 = arith.constant dense<0.000000e+00> : vector<8x128xf32>
    %61 = tpu.matmul %59, %60, %cst_28 {dimension_numbers = #tpu.dot_dimension_numbers<[1], [0], [0], [1], [0, 0, 1, 1], [], []>} : vector<8x128xbf16>, vector<128x128xbf16>, vector<8x128xf32> -> vector<8x128xf32>
    %c0_29 = arith.constant 0 : index
    %c0_30 = arith.constant 0 : index
    %62 = vector.load %arg8[%c0_29, %c0_30] : memref<1x128xf32, #tpu.memory_space<vmem>>, vector<1x128xf32>
    %63 = vector.broadcast %62 : vector<1x128xf32> to vector<8x128xf32>
    %64 = arith.addf %61, %63 : vector<8x128xf32>
    %cst_31 = arith.constant 2.000000e-01 : f32
    %65 = vector.broadcast %cst_31 : f32 to vector<8x128xf32>
    %66 = arith.mulf %65, %64 : vector<8x128xf32>
    %67 = arith.maximumf %64, %66 : vector<8x128xf32>
    %cst_32 = arith.constant dense<0.000000e+00> : vector<128xf32>
    %68 = vector.multi_reduction <add>, %67, %cst_32 [0] : vector<8x128xf32> to vector<128xf32>
    %69 = vector.shape_cast %68 : vector<128xf32> to vector<1x128xf32>
    %cst_33 = arith.constant 8.000000e+00 : f32
    %70 = vector.broadcast %cst_33 : f32 to vector<1x128xf32>
    %71 = arith.divf %69, %70 : vector<1x128xf32>
    %72 = vector.broadcast %71 : vector<1x128xf32> to vector<8x128xf32>
    %73 = arith.subf %67, %72 : vector<8x128xf32>
    %74 = arith.mulf %73, %73 : vector<8x128xf32>
    %cst_34 = arith.constant dense<0.000000e+00> : vector<128xf32>
    %75 = vector.multi_reduction <add>, %74, %cst_34 [0] : vector<8x128xf32> to vector<128xf32>
    %76 = vector.shape_cast %75 : vector<128xf32> to vector<1x128xf32>
    %cst_35 = arith.constant 8.000000e+00 : f32
    %77 = vector.broadcast %cst_35 : f32 to vector<1x128xf32>
    %78 = arith.divf %76, %77 : vector<1x128xf32>
    %c0_36 = arith.constant 0 : index
    %c0_37 = arith.constant 0 : index
    %79 = vector.load %arg9[%c0_36, %c0_37] : memref<1x128xf32, #tpu.memory_space<vmem>>, vector<1x128xf32>
    %cst_38 = arith.constant 9.99999974E-6 : f32
    %80 = vector.broadcast %cst_38 : f32 to vector<1x128xf32>
    %81 = arith.addf %78, %80 : vector<1x128xf32>
    %82 = math.rsqrt %81 : vector<1x128xf32>
    %83 = arith.mulf %79, %82 : vector<1x128xf32>
    %c0_39 = arith.constant 0 : index
    %c0_40 = arith.constant 0 : index
    %84 = vector.load %arg10[%c0_39, %c0_40] : memref<1x128xf32, #tpu.memory_space<vmem>>, vector<1x128xf32>
    %85 = arith.mulf %83, %71 : vector<1x128xf32>
    %86 = arith.subf %84, %85 : vector<1x128xf32>
    %87 = vector.broadcast %83 : vector<1x128xf32> to vector<8x128xf32>
    %88 = arith.mulf %67, %87 : vector<8x128xf32>
    %89 = vector.broadcast %86 : vector<1x128xf32> to vector<8x128xf32>
    %90 = arith.addf %88, %89 : vector<8x128xf32>
    %91 = arith.truncf %90 : vector<8x128xf32> to vector<8x128xbf16>
    %c0_41 = arith.constant 0 : index
    %c0_42 = arith.constant 0 : index
    %92 = vector.load %arg11[%c0_41, %c0_42] : memref<128x128xbf16, #tpu.memory_space<vmem>>, vector<128x128xbf16>
    %cst_43 = arith.constant dense<0.000000e+00> : vector<8x128xf32>
    %93 = tpu.matmul %91, %92, %cst_43 {dimension_numbers = #tpu.dot_dimension_numbers<[1], [0], [0], [1], [0, 0, 1, 1], [], []>} : vector<8x128xbf16>, vector<128x128xbf16>, vector<8x128xf32> -> vector<8x128xf32>
    %c0_44 = arith.constant 0 : index
    %c0_45 = arith.constant 0 : index
    %94 = vector.load %arg12[%c0_44, %c0_45] : memref<1x128xf32, #tpu.memory_space<vmem>>, vector<1x128xf32>
    %95 = vector.broadcast %94 : vector<1x128xf32> to vector<8x128xf32>
    %96 = arith.addf %93, %95 : vector<8x128xf32>
    %cst_46 = arith.constant 2.000000e-01 : f32
    %97 = vector.broadcast %cst_46 : f32 to vector<8x128xf32>
    %98 = arith.mulf %97, %96 : vector<8x128xf32>
    %99 = arith.maximumf %96, %98 : vector<8x128xf32>
    %cst_47 = arith.constant dense<0.000000e+00> : vector<128xf32>
    %100 = vector.multi_reduction <add>, %99, %cst_47 [0] : vector<8x128xf32> to vector<128xf32>
    %101 = vector.shape_cast %100 : vector<128xf32> to vector<1x128xf32>
    %cst_48 = arith.constant 8.000000e+00 : f32
    %102 = vector.broadcast %cst_48 : f32 to vector<1x128xf32>
    %103 = arith.divf %101, %102 : vector<1x128xf32>
    %104 = vector.broadcast %103 : vector<1x128xf32> to vector<8x128xf32>
    %105 = arith.subf %99, %104 : vector<8x128xf32>
    %106 = arith.mulf %105, %105 : vector<8x128xf32>
    %cst_49 = arith.constant dense<0.000000e+00> : vector<128xf32>
    %107 = vector.multi_reduction <add>, %106, %cst_49 [0] : vector<8x128xf32> to vector<128xf32>
    %108 = vector.shape_cast %107 : vector<128xf32> to vector<1x128xf32>
    %cst_50 = arith.constant 8.000000e+00 : f32
    %109 = vector.broadcast %cst_50 : f32 to vector<1x128xf32>
    %110 = arith.divf %108, %109 : vector<1x128xf32>
    %c0_51 = arith.constant 0 : index
    %c0_52 = arith.constant 0 : index
    %111 = vector.load %arg13[%c0_51, %c0_52] : memref<1x128xf32, #tpu.memory_space<vmem>>, vector<1x128xf32>
    %cst_53 = arith.constant 9.99999974E-6 : f32
    %112 = vector.broadcast %cst_53 : f32 to vector<1x128xf32>
    %113 = arith.addf %110, %112 : vector<1x128xf32>
    %114 = math.rsqrt %113 : vector<1x128xf32>
    %115 = arith.mulf %111, %114 : vector<1x128xf32>
    %c0_54 = arith.constant 0 : index
    %c0_55 = arith.constant 0 : index
    %116 = vector.load %arg14[%c0_54, %c0_55] : memref<1x128xf32, #tpu.memory_space<vmem>>, vector<1x128xf32>
    %117 = arith.mulf %115, %103 : vector<1x128xf32>
    %118 = arith.subf %116, %117 : vector<1x128xf32>
    %119 = vector.broadcast %115 : vector<1x128xf32> to vector<8x128xf32>
    %120 = arith.mulf %99, %119 : vector<8x128xf32>
    %121 = vector.broadcast %118 : vector<1x128xf32> to vector<8x128xf32>
    %122 = arith.addf %120, %121 : vector<8x128xf32>
    %123 = arith.truncf %122 : vector<8x128xf32> to vector<8x128xbf16>
    %c0_56 = arith.constant 0 : index
    %c0_57 = arith.constant 0 : index
    %124 = vector.load %arg15[%c0_56, %c0_57] : memref<128x128xbf16, #tpu.memory_space<vmem>>, vector<128x128xbf16>
    %cst_58 = arith.constant dense<0.000000e+00> : vector<8x128xf32>
    %125 = tpu.matmul %123, %124, %cst_58 {dimension_numbers = #tpu.dot_dimension_numbers<[1], [0], [0], [1], [0, 0, 1, 1], [], []>} : vector<8x128xbf16>, vector<128x128xbf16>, vector<8x128xf32> -> vector<8x128xf32>
    %c0_59 = arith.constant 0 : index
    %c0_60 = arith.constant 0 : index
    %126 = vector.load %arg16[%c0_59, %c0_60] : memref<1x128xf32, #tpu.memory_space<vmem>>, vector<1x128xf32>
    %127 = vector.broadcast %126 : vector<1x128xf32> to vector<8x128xf32>
    %128 = arith.addf %125, %127 : vector<8x128xf32>
    %129 = arith.addf %122, %128 : vector<8x128xf32>
    %130 = arith.truncf %129 : vector<8x128xf32> to vector<8x128xbf16>
    %c0_61 = arith.constant 0 : index
    %c0_62 = arith.constant 0 : index
    %131 = vector.load %arg17[%c0_61, %c0_62] : memref<128x128xbf16, #tpu.memory_space<vmem>>, vector<128x128xbf16>
    %cst_63 = arith.constant dense<0.000000e+00> : vector<8x128xf32>
    %132 = tpu.matmul %130, %131, %cst_63 {dimension_numbers = #tpu.dot_dimension_numbers<[1], [0], [0], [1], [0, 0, 1, 1], [], []>} : vector<8x128xbf16>, vector<128x128xbf16>, vector<8x128xf32> -> vector<8x128xf32>
    %c0_64 = arith.constant 0 : index
    %c0_65 = arith.constant 0 : index
    %133 = vector.load %arg18[%c0_64, %c0_65] : memref<1x128xf32, #tpu.memory_space<vmem>>, vector<1x128xf32>
    %134 = vector.broadcast %133 : vector<1x128xf32> to vector<8x128xf32>
    %135 = arith.addf %132, %134 : vector<8x128xf32>
    %136 = math.tanh %135 : vector<8x128xf32>
    %137 = arith.truncf %136 : vector<8x128xf32> to vector<8x128xbf16>
    %c0_66 = arith.constant 0 : index
    %c0_67 = arith.constant 0 : index
    %138 = vector.load %arg19[%c0_66, %c0_67] : memref<8x128xbf16, #tpu.memory_space<vmem>>, vector<8x128xbf16>
    tpu.vector_store %arg19[%c0_66, %c0_67], %137 {strides = array<i32>} : memref<8x128xbf16, #tpu.memory_space<vmem>>, vector<8x128xbf16>,
    return
  }
}

</mosaic_0001>

<llo_original>
// kernel: tpu_custom_call.1
$region0: #{tpu_custom_call.1}
  #allocation0 [shape = 'u32[]', space=smem, size = 0x4, offset = 0x4, fixed_abs, tag = 'smem constant byte address 0x4 - core index']
  #allocation1 [shape = 'u32[72,128]{1,0:T(1,128)}', space=vmem, size = 0x9000, scoped, tag = 'internal scratch']
  %s0 = inlined_call_operand.hbm [shape: bf16[8,16], index: 0, kind: input, shape index: {}]
  %s1 = inlined_call_operand.hbm [shape: bf16[16,384], index: 1, kind: input, shape index: {}]
  %s2 = inlined_call_operand.hbm [shape: f32[1,384], index: 2, kind: input, shape index: {}]
  %s3 = inlined_call_operand.hbm [shape: bf16[128,128], index: 3, kind: input, shape index: {}]
  %s4 = inlined_call_operand.vmem [shape: f32[1,128], index: 4, kind: input, shape index: {}]
  %s5 = inlined_call_operand.vmem [shape: f32[1,128], index: 5, kind: input, shape index: {}]
  %s6 = inlined_call_operand.vmem [shape: f32[1,128], index: 6, kind: input, shape index: {}]
  %s7 = inlined_call_operand.hbm [shape: bf16[128,128], index: 7, kind: input, shape index: {}]
  %s8 = inlined_call_operand.vmem [shape: f32[1,128], index: 8, kind: input, shape index: {}]
  %s9 = inlined_call_operand.vmem [shape: f32[1,128], index: 9, kind: input, shape index: {}]
  %s10 = inlined_call_operand.vmem [shape: f32[1,128], index: 10, kind: input, shape index: {}]
  %s11 = inlined_call_operand.hbm [shape: bf16[128,128], index: 11, kind: input, shape index: {}]
  %s12 = inlined_call_operand.vmem [shape: f32[1,128], index: 12, kind: input, shape index: {}]
  %s13 = inlined_call_operand.vmem [shape: f32[1,128], index: 13, kind: input, shape index: {}]
  %s14 = inlined_call_operand.vmem [shape: f32[1,128], index: 14, kind: input, shape index: {}]
  %s15 = inlined_call_operand.hbm [shape: bf16[128,128], index: 15, kind: input, shape index: {}]
  %s16 = inlined_call_operand.vmem [shape: f32[1,128], index: 16, kind: input, shape index: {}]
  %s17 = inlined_call_operand.hbm [shape: bf16[128,128], index: 17, kind: input, shape index: {}]
  %s18 = inlined_call_operand.vmem [shape: f32[1,128], index: 18, kind: input, shape index: {}]
  %s19 = inlined_call_operand.hbm [shape: bf16[8,128], index: 19, kind: output, shape index: {}]
  %s20 = sld [smem:[#allocation0]]
  $region118: #{tpu_custom_call.1} parent=0
    _
  %s22 = ssub.s32 1, %s20
  %s23 = scalar_select 0, %s22, %s20
  $region1: #{tpu_custom_call.1} parent=0
    #allocation2 [shape = 'u8[2048]{0}', space=vmem, size = 0x800, scoped, tag = 'input window, operand 0, single buffered']
    #allocation3 [shape = 's32[1]{0}', space=sflag, size = 0x4, scoped, tag = 'scoped memory for tpu_custom_call.1']
    #allocation4 [shape = 's32[1]{0}', space=sflag, size = 0x4, scoped, tag = 'scoped memory for tpu_custom_call.1']
    #allocation5 [shape = 'u8[12288]{0}', space=vmem, size = 0x3000, scoped, tag = 'input window, operand 1, single buffered']
    #allocation6 [shape = 's32[1]{0}', space=sflag, size = 0x4, scoped, tag = 'scoped memory for tpu_custom_call.1']
    #allocation7 [shape = 'u8[1536]{0}', space=vmem, size = 0x800, scoped, tag = 'input window, operand 2, single buffered']
    #allocation8 [shape = 'u8[32768]{0}', space=vmem, size = 0x8000, scoped, tag = 'input window, operand 3, single buffered']
    #allocation9 [shape = 's32[1]{0}', space=sflag, size = 0x4, scoped, tag = 'scoped memory for tpu_custom_call.1']
    #allocation10 [shape = 'u8[32768]{0}', space=vmem, size = 0x8000, scoped, tag = 'input window, operand 7, single buffered']
    #allocation11 [shape = 'u8[32768]{0}', space=vmem, size = 0x8000, scoped, tag = 'input window, operand 11, single buffered']
    #allocation12 [shape = 's32[1]{0}', space=sflag, size = 0x4, scoped, tag = 'scoped memory for tpu_custom_call.1']
    #allocation13 [shape = 'u8[32768]{0}', space=vmem, size = 0x8000, scoped, tag = 'input window, operand 15, single buffered']
    #allocation14 [shape = 'u8[32768]{0}', space=vmem, size = 0x8000, scoped, tag = 'input window, operand 17, single buffered']
    #allocation15 [shape = 's32[1]{0}', space=sflag, size = 0x4, scoped, tag = 'scoped memory for tpu_custom_call.1']
    #allocation16 [shape = 'u8[2048]{0}', space=vmem, size = 0x800, scoped, tag = 'output window, operand 0, single buffered']
    %24 = vsyncpa [#allocation3], 0
    %25 = vsyncpa [#allocation6], 0
    %26 = vsyncpa [#allocation9], 0
    %27 = vsyncpa [#allocation12], 0
    %28 = vsyncpa [#allocation15], 0
    %29 = vsyncpa [#allocation4], 0
    // Predicated region
    $region2: #{tpu_custom_call.1} parent=1 // pred_check
      _
    $region3: #{tpu_custom_call.1} parent=1 // pred_check_branch
      %31 = sbr.rel (0) target = $region5
    $region4: #{tpu_custom_call.1} parent=1 // pred_region
      %33 = vsyncadd [#allocation3], 0
      %s35 = sshll.u32 %s0, 4
      %s36 = int_to_ptr.hbm [resolvable:$true] %s35
      %s37 = sshll.u32 [#allocation2], 4
      %s38 = int_to_ptr.vmem [resolvable:$true] %s37
      %40 = dma.hbm_to_vmem [thread:$0]  %s36, 64, %s38, [#allocation3]
    $region5: #{tpu_custom_call.1} parent=1 // pred_fallthru
      _
    // Predicated region
    $region6: #{tpu_custom_call.1} parent=1 // pred_check
      _
    $region7: #{tpu_custom_call.1} parent=1 // pred_check_branch
      %42 = sbr.rel (0) target = $region9
    $region8: #{tpu_custom_call.1} parent=1 // pred_region
      %44 = vsyncadd [#allocation6], 0
      %s45 = sshll.u32 %s1, 4
      %s46 = int_to_ptr.hbm [resolvable:$true] %s45
      %s47 = sshll.u32 [#allocation5], 4
      %s48 = int_to_ptr.vmem [resolvable:$true] %s47
      %53 = dma.hbm_to_vmem [thread:$0]  %s46, 384, %s48, [#allocation6], 192, 192, 12
    $region9: #{tpu_custom_call.1} parent=1 // pred_fallthru
      _
    // Predicated region
    $region10: #{tpu_custom_call.1} parent=1 // pred_check
      _
    $region11: #{tpu_custom_call.1} parent=1 // pred_check_branch
      %55 = sbr.rel (0) target = $region13
    $region12: #{tpu_custom_call.1} parent=1 // pred_region
      %57 = vsyncadd [#allocation6], 0
      %s59 = sshll.u32 %s2, 4
      %s60 = int_to_ptr.hbm [resolvable:$true] %s59
      %s61 = sshll.u32 [#allocation7], 4
      %s62 = int_to_ptr.vmem [resolvable:$true] %s61
      %64 = dma.hbm_to_vmem [thread:$0]  %s60, 48, %s62, [#allocation6]
    $region13: #{tpu_custom_call.1} parent=1 // pred_fallthru
      _
    // Predicated region
    $region14: #{tpu_custom_call.1} parent=1 // pred_check
      _
    $region15: #{tpu_custom_call.1} parent=1 // pred_check_branch
      %66 = sbr.rel (0) target = $region17
    $region16: #{tpu_custom_call.1} parent=1 // pred_region
      %68 = vsyncadd [#allocation9], 0
      %s69 = sshll.u32 %s3, 4
      %s70 = int_to_ptr.hbm [resolvable:$true] %s69
      %s71 = sshll.u32 [#allocation8], 4
      %s72 = int_to_ptr.vmem [resolvable:$true] %s71
      %77 = dma.hbm_to_vmem [thread:$0]  %s70, 1024, %s72, [#allocation9], 64, 64, 4
    $region17: #{tpu_custom_call.1} parent=1 // pred_fallthru
      _
    // Predicated region
    $region18: #{tpu_custom_call.1} parent=1 // pred_check
      _
    $region19: #{tpu_custom_call.1} parent=1 // pred_check_branch
      %79 = sbr.rel (0) target = $region21
    $region20: #{tpu_custom_call.1} parent=1 // pred_region
      _
    $region21: #{tpu_custom_call.1} parent=1 // pred_fallthru
      _
    // Predicated region
    $region22: #{tpu_custom_call.1} parent=1 // pred_check
      _
    $region23: #{tpu_custom_call.1} parent=1 // pred_check_branch
      %81 = sbr.rel (0) target = $region25
    $region24: #{tpu_custom_call.1} parent=1 // pred_region
      _
    $region25: #{tpu_custom_call.1} parent=1 // pred_fallthru
      _
    // Predicated region
    $region26: #{tpu_custom_call.1} parent=1 // pred_check
      _
    $region27: #{tpu_custom_call.1} parent=1 // pred_check_branch
      %83 = sbr.rel (0) target = $region29
    $region28: #{tpu_custom_call.1} parent=1 // pred_region
      _
    $region29: #{tpu_custom_call.1} parent=1 // pred_fallthru
      _
    // Predicated region
    $region30: #{tpu_custom_call.1} parent=1 // pred_check
      _
    $region31: #{tpu_custom_call.1} parent=1 // pred_check_branch
      %85 = sbr.rel (0) target = $region33
    $region32: #{tpu_custom_call.1} parent=1 // pred_region
      %87 = vsyncadd [#allocation9], 0
      %s88 = sshll.u32 %s7, 4
      %s89 = int_to_ptr.hbm [resolvable:$true] %s88
      %s90 = sshll.u32 [#allocation10], 4
      %s91 = int_to_ptr.vmem [resolvable:$true] %s90
      %96 = dma.hbm_to_vmem [thread:$0]  %s89, 1024, %s91, [#allocation9], 64, 64, 4
    $region33: #{tpu_custom_call.1} parent=1 // pred_fallthru
      _
    // Predicated region
    $region34: #{tpu_custom_call.1} parent=1 // pred_check
      _
    $region35: #{tpu_custom_call.1} parent=1 // pred_check_branch
      %98 = sbr.rel (0) target = $region37
    $region36: #{tpu_custom_call.1} parent=1 // pred_region
      _
    $region37: #{tpu_custom_call.1} parent=1 // pred_fallthru
      _
    // Predicated region
    $region38: #{tpu_custom_call.1} parent=1 // pred_check
      _
    $region39: #{tpu_custom_call.1} parent=1 // pred_check_branch
      %100 = sbr.rel (0) target = $region41
    $region40: #{tpu_custom_call.1} parent=1 // pred_region
      _
    $region41: #{tpu_custom_call.1} parent=1 // pred_fallthru
      _
    // Predicated region
    $region42: #{tpu_custom_call.1} parent=1 // pred_check
      _
    $region43: #{tpu_custom_call.1} parent=1 // pred_check_branch
      %102 = sbr.rel (0) target = $region45
    $region44: #{tpu_custom_call.1} parent=1 // pred_region
      _
    $region45: #{tpu_custom_call.1} parent=1 // pred_fallthru
      _
    // Predicated region
    $region46: #{tpu_custom_call.1} parent=1 // pred_check
      _
    $region47: #{tpu_custom_call.1} parent=1 // pred_check_branch
      %104 = sbr.rel (0) target = $region49
    $region48: #{tpu_custom_call.1} parent=1 // pred_region
      %106 = vsyncadd [#allocation12], 0
      %s107 = sshll.u32 %s11, 4
      %s108 = int_to_ptr.hbm [resolvable:$true] %s107
      %s109 = sshll.u32 [#allocation11], 4
      %s110 = int_to_ptr.vmem [resolvable:$true] %s109
      %115 = dma.hbm_to_vmem [thread:$0]  %s108, 1024, %s110, [#allocation12], 64, 64, 4
    $region49: #{tpu_custom_call.1} parent=1 // pred_fallthru
      _
    // Predicated region
    $region50: #{tpu_custom_call.1} parent=1 // pred_check
      _
    $region51: #{tpu_custom_call.1} parent=1 // pred_check_branch
      %117 = sbr.rel (0) target = $region53
    $region52: #{tpu_custom_call.1} parent=1 // pred_region
      _
    $region53: #{tpu_custom_call.1} parent=1 // pred_fallthru
      _
    // Predicated region
    $region54: #{tpu_custom_call.1} parent=1 // pred_check
      _
    $region55: #{tpu_custom_call.1} parent=1 // pred_check_branch
      %119 = sbr.rel (0) target = $region57
    $region56: #{tpu_custom_call.1} parent=1 // pred_region
      _
    $region57: #{tpu_custom_call.1} parent=1 // pred_fallthru
      _
    // Predicated region
    $region58: #{tpu_custom_call.1} parent=1 // pred_check
      _
    $region59: #{tpu_custom_call.1} parent=1 // pred_check_branch
      %121 = sbr.rel (0) target = $region61
    $region60: #{tpu_custom_call.1} parent=1 // pred_region
      _
    $region61: #{tpu_custom_call.1} parent=1 // pred_fallthru
      _
    // Predicated region
    $region62: #{tpu_custom_call.1} parent=1 // pred_check
      _
    $region63: #{tpu_custom_call.1} parent=1 // pred_check_branch
      %123 = sbr.rel (0) target = $region65
    $region64: #{tpu_custom_call.1} parent=1 // pred_region
      %125 = vsyncadd [#allocation12], 0
      %s126 = sshll.u32 %s15, 4
      %s127 = int_to_ptr.hbm [resolvable:$true] %s126
      %s128 = sshll.u32 [#allocation13], 4
      %s129 = int_to_ptr.vmem [resolvable:$true] %s128
      %134 = dma.hbm_to_vmem [thread:$0]  %s127, 1024, %s129, [#allocation12], 64, 64, 4
    $region65: #{tpu_custom_call.1} parent=1 // pred_fallthru
      _
    // Predicated region
    $region66: #{tpu_custom_call.1} parent=1 // pred_check
      _
    $region67: #{tpu_custom_call.1} parent=1 // pred_check_branch
      %136 = sbr.rel (0) target = $region69
    $region68: #{tpu_custom_call.1} parent=1 // pred_region
      _
    $region69: #{tpu_custom_call.1} parent=1 // pred_fallthru
      _
    // Predicated region
    $region70: #{tpu_custom_call.1} parent=1 // pred_check
      _
    $region71: #{tpu_custom_call.1} parent=1 // pred_check_branch
      %138 = sbr.rel (0) target = $region73
    $region72: #{tpu_custom_call.1} parent=1 // pred_region
      %140 = vsyncadd [#allocation15], 0
      %s141 = sshll.u32 %s17, 4
      %s142 = int_to_ptr.hbm [resolvable:$true] %s141
      %s143 = sshll.u32 [#allocation14], 4
      %s144 = int_to_ptr.vmem [resolvable:$true] %s143
      %149 = dma.hbm_to_vmem [thread:$0]  %s142, 1024, %s144, [#allocation15], 64, 64, 4
    $region73: #{tpu_custom_call.1} parent=1 // pred_fallthru
      _
    // Predicated region
    $region74: #{tpu_custom_call.1} parent=1 // pred_check
      _
    $region75: #{tpu_custom_call.1} parent=1 // pred_check_branch
      %151 = sbr.rel (0) target = $region77
    $region76: #{tpu_custom_call.1} parent=1 // pred_region
      _
    $region77: #{tpu_custom_call.1} parent=1 // pred_fallthru
      _
    // Predicated region
    $region78: #{tpu_custom_call.1} parent=1 // pred_check
      _
    $region79: #{tpu_custom_call.1} parent=1 // pred_check_branch
      %153 = sbr.rel (0) target = $region81
    $region80: #{tpu_custom_call.1} parent=1 // pred_region
      %155 = dma.done [#allocation3], 64
    $region81: #{tpu_custom_call.1} parent=1 // pred_fallthru
      _
    // Predicated region
    $region82: #{tpu_custom_call.1} parent=1 // pred_check
      _
    $region83: #{tpu_custom_call.1} parent=1 // pred_check_branch
      %157 = sbr.rel (0) target = $region85
    $region84: #{tpu_custom_call.1} parent=1 // pred_region
      %159 = dma.done [#allocation6], 384
    $region85: #{tpu_custom_call.1} parent=1 // pred_fallthru
      _
    // Predicated region
    $region86: #{tpu_custom_call.1} parent=1 // pred_check
      _
    $region87: #{tpu_custom_call.1} parent=1 // pred_check_branch
      %161 = sbr.rel (0) target = $region89
    $region88: #{tpu_custom_call.1} parent=1 // pred_region
      %163 = dma.done [#allocation6], 48
    $region89: #{tpu_custom_call.1} parent=1 // pred_fallthru
      _
    // Predicated region
    $region90: #{tpu_custom_call.1} parent=1 // pred_check
      _
    $region91: #{tpu_custom_call.1} parent=1 // pred_check_branch
      %165 = sbr.rel (0) target = $region93
    $region92: #{tpu_custom_call.1} parent=1 // pred_region
      %167 = dma.done [#allocation9], 1024
    $region93: #{tpu_custom_call.1} parent=1 // pred_fallthru
      _
    // Predicated region
    $region94: #{tpu_custom_call.1} parent=1 // pred_check
      _
    $region95: #{tpu_custom_call.1} parent=1 // pred_check_branch
      %169 = sbr.rel (0) target = $region97
    $region96: #{tpu_custom_call.1} parent=1 // pred_region
      %171 = dma.done [#allocation9], 1024
    $region97: #{tpu_custom_call.1} parent=1 // pred_fallthru
      _
    // Predicated region
    $region98: #{tpu_custom_call.1} parent=1 // pred_check
      _
    $region99: #{tpu_custom_call.1} parent=1 // pred_check_branch
      %173 = sbr.rel (0) target = $region101
    $region100: #{tpu_custom_call.1} parent=1 // pred_region
      %175 = dma.done [#allocation12], 1024
    $region101: #{tpu_custom_call.1} parent=1 // pred_fallthru
      _
    // Predicated region
    $region102: #{tpu_custom_call.1} parent=1 // pred_check
      _
    $region103: #{tpu_custom_call.1} parent=1 // pred_check_branch
      %177 = sbr.rel (0) target = $region105
    $region104: #{tpu_custom_call.1} parent=1 // pred_region
      %179 = dma.done [#allocation12], 1024
    $region105: #{tpu_custom_call.1} parent=1 // pred_fallthru
      _
    // Predicated region
    $region106: #{tpu_custom_call.1} parent=1 // pred_check
      _
    $region107: #{tpu_custom_call.1} parent=1 // pred_check_branch
      %181 = sbr.rel (0) target = $region109
    $region108: #{tpu_custom_call.1} parent=1 // pred_region
      %183 = dma.done [#allocation15], 1024
    $region109: #{tpu_custom_call.1} parent=1 // pred_fallthru
      _
    %v185 = vld [vmem:[#allocation2] sm:$0xf]
    %v186 = vld [vmem:[#allocation5] sm:$0xff]
    %v187 = vld [vmem:[#allocation5 + $0x8] sm:$0xf]
    %v188 = vld [vmem:[#allocation5 + $0xc] sm:$0xff]
    %v189 = vld [vmem:[#allocation5 + $0x14] sm:$0xf]
    %v190 = vld [vmem:[#allocation7] sm:$0x7]
    %v192 = vperm.slane %v190, 0
    %v193 = vperm.slane %v190, 1
    %v194 = vperm.slane %v190, 2
    %v202 = vunpack.c.l.b16 %v186
    %v203 = vunpack.c.h.b16 %v186
    %v204 = vunpack.c.l.b16 %v187
    %v205 = vunpack.c.l.b16 %v188
    %v206 = vunpack.c.h.b16 %v188
    %v207 = vunpack.c.l.b16 %v189
    %v208 = vpack.c.b16 %v205, %v202
    %v209 = vpack.c.b16 %v206, %v203
    %v210 = vpack.c.b16 %v207, %v204
    %vm214 = vcmask 130048
    %v216 = vsel %vm214, %v185, 0
    %218 = vmatpush.bf16.msra.mxu0 0
    %219 = vmatpush.bf16.msra.mxu0 0
    %220 = vmatpush.bf16.msra.mxu0 0
    %221 = vmatpush.bf16.msra.mxu0 0
    %222 = vmatpush.bf16.msra.mxu0 0
    %223 = vmatpush.bf16.msra.mxu0 0
    %224 = vmatpush.bf16.msra.mxu0 0
    %225 = vmatpush.bf16.msra.mxu0 %v208
    %226 = vmatmul.bf16.gmra.mxu0 %v216
    %v227 = vpop.f32.mrf.mxu0
    %v228 = vadd.f32 %v192, %v227
    %v229 = vpop.f32.mrf.mxu0
    %230 = vdwg.mxu0
    %231 = vmatpush.bf16.msra.mxu0 0
    %232 = vmatpush.bf16.msra.mxu0 0
    %233 = vmatpush.bf16.msra.mxu0 0
    %234 = vmatpush.bf16.msra.mxu0 0
    %235 = vmatpush.bf16.msra.mxu0 0
    %236 = vmatpush.bf16.msra.mxu0 0
    %237 = vmatpush.bf16.msra.mxu0 0
    %238 = vmatpush.bf16.msra.mxu0 %v209
    %239 = vmatmul.bf16.gmra.mxu0 %v216
    %v240 = vpop.f32.mrf.mxu0
    %v241 = vadd.f32 %v193, %v240
    %v242 = vpop.f32.mrf.mxu0
    %243 = vdwg.mxu0
    %244 = vmatpush.bf16.msra.mxu0 0
    %245 = vmatpush.bf16.msra.mxu0 0
    %246 = vmatpush.bf16.msra.mxu0 0
    %247 = vmatpush.bf16.msra.mxu0 0
    %248 = vmatpush.bf16.msra.mxu0 0
    %249 = vmatpush.bf16.msra.mxu0 0
    %250 = vmatpush.bf16.msra.mxu0 0
    %251 = vmatpush.bf16.msra.mxu0 %v210
    %252 = vmatmul.bf16.gmra.mxu0 %v216
    %v253 = vpop.f32.mrf.mxu0
    %v254 = vadd.f32 %v194, %v253
    %v255 = vpop.f32.mrf.mxu0
    %256 = vdwg.mxu0
    %v257 = vmul.f32 %v228, 0.5
    %v258 = vtanh.pop %v257
    %v259 = vmul.f32 %v258, 0.5
    %v260 = vadd.f32 %v259, 0.5
    %v261 = vtanh.pop %v241
    %v262 = vmul.f32 %v254, 0.5
    %v263 = vtanh.pop %v262
    %v264 = vmul.f32 %v263, 0.5
    %v265 = vadd.f32 %v264, 0.5
    %v266 = vmul.f32 %v260, %v261
    %v267 = vtanh.pop %v266
    %v268 = vmul.f32 %v265, %v267
    %v269 = vpack.c.bf16 %v268, %v268
    %v270 = vld [vmem:[#allocation8] sm:$0xf]
    %v271 = vld [vmem:[#allocation8 + $0x4] sm:$0xf]
    %v272 = vld [vmem:[#allocation8 + $0x8] sm:$0xf]
    %v273 = vld [vmem:[#allocation8 + $0xc] sm:$0xf]
    %v274 = vld [vmem:[#allocation8 + $0x10] sm:$0xf]
    %v275 = vld [vmem:[#allocation8 + $0x14] sm:$0xf]
    %v276 = vld [vmem:[#allocation8 + $0x18] sm:$0xf]
    %v277 = vld [vmem:[#allocation8 + $0x1c] sm:$0xf]
    %v278 = vld [vmem:[#allocation8 + $0x20] sm:$0xf]
    %v279 = vld [vmem:[#allocation8 + $0x24] sm:$0xf]
    %v280 = vld [vmem:[#allocation8 + $0x28] sm:$0xf]
    %v281 = vld [vmem:[#allocation8 + $0x2c] sm:$0xf]
    %v282 = vld [vmem:[#allocation8 + $0x30] sm:$0xf]
    %v283 = vld [vmem:[#allocation8 + $0x34] sm:$0xf]
    %v284 = vld [vmem:[#allocation8 + $0x38] sm:$0xf]
    %v285 = vld [vmem:[#allocation8 + $0x3c] sm:$0xf]
    %v286 = vld [vmem:[%s4] sm:$0x1]
    %v288 = vperm.slane %v286, 0
    %v306 = vunpack.c.l.b16 %v270
    %v307 = vunpack.c.l.b16 %v271
    %v308 = vunpack.c.l.b16 %v272
    %v309 = vunpack.c.l.b16 %v273
    %v310 = vunpack.c.l.b16 %v274
    %v311 = vunpack.c.l.b16 %v275
    %v312 = vunpack.c.l.b16 %v276
    %v313 = vunpack.c.l.b16 %v277
    %v314 = vunpack.c.l.b16 %v278
    %v315 = vunpack.c.l.b16 %v279
    %v316 = vunpack.c.l.b16 %v280
    %v317 = vunpack.c.l.b16 %v281
    %v318 = vunpack.c.l.b16 %v282
    %v319 = vunpack.c.l.b16 %v283
    %v320 = vunpack.c.l.b16 %v284
    %v321 = vunpack.c.l.b16 %v285
    %v322 = vpack.c.b16 %v307, %v306
    %v323 = vpack.c.b16 %v309, %v308
    %v324 = vpack.c.b16 %v311, %v310
    %v325 = vpack.c.b16 %v313, %v312
    %v326 = vpack.c.b16 %v315, %v314
    %v327 = vpack.c.b16 %v317, %v316
    %v328 = vpack.c.b16 %v319, %v318
    %v329 = vpack.c.b16 %v321, %v320
    %338 = vmatpush.bf16.msra.mxu0 %v329
    %339 = vmatpush.bf16.msra.mxu0 %v328
    %340 = vmatpush.bf16.msra.mxu0 %v327
    %341 = vmatpush.bf16.msra.mxu0 %v326
    %342 = vmatpush.bf16.msra.mxu0 %v325
    %343 = vmatpush.bf16.msra.mxu0 %v324
    %344 = vmatpush.bf16.msra.mxu0 %v323
    %345 = vmatpush.bf16.msra.mxu0 %v322
    %346 = vmatmul.bf16.gmra.mxu0 %v269
    %v347 = vpop.f32.mrf.mxu0
    %v348 = vadd.f32 %v288, %v347
    %v349 = vpop.f32.mrf.mxu0
    %350 = vdwg.mxu0
    %v351 = vmul.f32 %v348, 0.2
    %v352 = vmax.f32 %v348, %v351
    %v353 = vrot.slane %v352, 4
    %v354 = vadd.f32 %v352, %v353
    %v355 = vrot.slane %v354, 2
    %v356 = vadd.f32 %v354, %v355
    %v357 = vrot.slane %v356, 1
    %v358 = vadd.f32 %v356, %v357
    %v359 = vrcp.pop 8.0
    %v360 = vmul.f32 8.0, %v359
    %v361 = vsub.f32 1.0, %v360
    %v362 = vmul.f32 %v359, %v361
    %v363 = vadd.f32 %v359, %v362
    %vm364 = vweird.f32 %v359
    %v365 = vsel %vm364, %v359, %v363
    %v366 = vmul.f32 %v358, %v365
    %v367 = vsub.f32 %v352, %v366
    %v368 = vmul.f32 %v367, %v367
    %v369 = vrot.slane %v368, 4
    %v370 = vadd.f32 %v368, %v369
    %v371 = vrot.slane %v370, 2
    %v372 = vadd.f32 %v370, %v371
    %v373 = vrot.slane %v372, 1
    %v374 = vadd.f32 %v372, %v373
    %v375 = vmul.f32 %v374, %v365
    %v376 = vld [vmem:[%s5] sm:$0x1]
    %v377 = vadd.f32 %v375, 1e-05
    %v378 = vrsqrt.pop %v377
    %v379 = vmul.f32 %v378, %v377
    %v380 = vmul.f32 %v379, %v378
    %v381 = vmul.f32 0.5, %v380
    %v382 = vsub.f32 1.5, %v381
    %v383 = vmul.f32 %v378, %v382
    %vm384 = vweird.f32 %v377
    %vm385 = vweird.f32 %v378
    %vm386 = vmor %vm384, %vm385
    %v387 = vsel %vm386, %v378, %v383
    %v388 = vmul.f32 %v376, %v387
    %v389 = vld [vmem:[%s6] sm:$0x1]
    %v390 = vmul.f32 %v388, %v366
    %v391 = vsub.f32 %v389, %v390
    %v393 = vperm.slane %v388, 0
    %v395 = vmul.f32 %v352, %v393
    %v397 = vperm.slane %v391, 0
    %v399 = vadd.f32 %v395, %v397
    %v400 = vpack.c.bf16 %v399, %v399
    %v401 = vld [vmem:[#allocation10] sm:$0xf]
    %v402 = vld [vmem:[#allocation10 + $0x4] sm:$0xf]
    %v403 = vld [vmem:[#allocation10 + $0x8] sm:$0xf]
    %v404 = vld [vmem:[#allocation10 + $0xc] sm:$0xf]
    %v405 = vld [vmem:[#allocation10 + $0x10] sm:$0xf]
    %v406 = vld [vmem:[#allocation10 + $0x14] sm:$0xf]
    %v407 = vld [vmem:[#allocation10 + $0x18] sm:$0xf]
    %v408 = vld [vmem:[#allocation10 + $0x1c] sm:$0xf]
    %v409 = vld [vmem:[#allocation10 + $0x20] sm:$0xf]
    %v410 = vld [vmem:[#allocation10 + $0x24] sm:$0xf]
    %v411 = vld [vmem:[#allocation10 + $0x28] sm:$0xf]
    %v412 = vld [vmem:[#allocation10 + $0x2c] sm:$0xf]
    %v413 = vld [vmem:[#allocation10 + $0x30] sm:$0xf]
    %v414 = vld [vmem:[#allocation10 + $0x34] sm:$0xf]
    %v415 = vld [vmem:[#allocation10 + $0x38] sm:$0xf]
    %v416 = vld [vmem:[#allocation10 + $0x3c] sm:$0xf]
    %v417 = vld [vmem:[%s8] sm:$0x1]
    %v419 = vperm.slane %v417, 0
    %v437 = vunpack.c.l.b16 %v401
    %v438 = vunpack.c.l.b16 %v402
    %v439 = vunpack.c.l.b16 %v403
    %v440 = vunpack.c.l.b16 %v404
    %v441 = vunpack.c.l.b16 %v405
    %v442 = vunpack.c.l.b16 %v406
    %v443 = vunpack.c.l.b16 %v407
    %v444 = vunpack.c.l.b16 %v408
    %v445 = vunpack.c.l.b16 %v409
    %v446 = vunpack.c.l.b16 %v410
    %v447 = vunpack.c.l.b16 %v411
    %v448 = vunpack.c.l.b16 %v412
    %v449 = vunpack.c.l.b16 %v413
    %v450 = vunpack.c.l.b16 %v414
    %v451 = vunpack.c.l.b16 %v415
    %v452 = vunpack.c.l.b16 %v416
    %v453 = vpack.c.b16 %v438, %v437
    %v454 = vpack.c.b16 %v440, %v439
    %v455 = vpack.c.b16 %v442, %v441
    %v456 = vpack.c.b16 %v444, %v443
    %v457 = vpack.c.b16 %v446, %v445
    %v458 = vpack.c.b16 %v448, %v447
    %v459 = vpack.c.b16 %v450, %v449
    %v460 = vpack.c.b16 %v452, %v451
    %469 = vmatpush.bf16.msra.mxu0 %v460
    %470 = vmatpush.bf16.msra.mxu0 %v459
    %471 = vmatpush.bf16.msra.mxu0 %v458
    %472 = vmatpush.bf16.msra.mxu0 %v457
    %473 = vmatpush.bf16.msra.mxu0 %v456
    %474 = vmatpush.bf16.msra.mxu0 %v455
    %475 = vmatpush.bf16.msra.mxu0 %v454
    %476 = vmatpush.bf16.msra.mxu0 %v453
    %477 = vmatmul.bf16.gmra.mxu0 %v400
    %v478 = vpop.f32.mrf.mxu0
    %v479 = vadd.f32 %v419, %v478
    %v480 = vpop.f32.mrf.mxu0
    %481 = vdwg.mxu0
    %v482 = vmul.f32 %v479, 0.2
    %v483 = vmax.f32 %v479, %v482
    %v484 = vrot.slane %v483, 4
    %v485 = vadd.f32 %v483, %v484
    %v486 = vrot.slane %v485, 2
    %v487 = vadd.f32 %v485, %v486
    %v488 = vrot.slane %v487, 1
    %v489 = vadd.f32 %v487, %v488
    %v490 = vmul.f32 %v489, %v365
    %v491 = vsub.f32 %v483, %v490
    %v492 = vmul.f32 %v491, %v491
    %v493 = vrot.slane %v492, 4
    %v494 = vadd.f32 %v492, %v493
    %v495 = vrot.slane %v494, 2
    %v496 = vadd.f32 %v494, %v495
    %v497 = vrot.slane %v496, 1
    %v498 = vadd.f32 %v496, %v497
    %v499 = vmul.f32 %v498, %v365
    %v500 = vld [vmem:[%s9] sm:$0x1]
    %v501 = vadd.f32 %v499, 1e-05
    %v502 = vrsqrt.pop %v501
    %v503 = vmul.f32 %v502, %v501
    %v504 = vmul.f32 %v503, %v502
    %v505 = vmul.f32 0.5, %v504
    %v506 = vsub.f32 1.5, %v505
    %v507 = vmul.f32 %v502, %v506
    %vm508 = vweird.f32 %v501
    %vm509 = vweird.f32 %v502
    %vm510 = vmor %vm508, %vm509
    %v511 = vsel %vm510, %v502, %v507
    %v512 = vmul.f32 %v500, %v511
    %v513 = vld [vmem:[%s10] sm:$0x1]
    %v514 = vmul.f32 %v512, %v490
    %v515 = vsub.f32 %v513, %v514
    %v517 = vperm.slane %v512, 0
    %v519 = vmul.f32 %v483, %v517
    %v521 = vperm.slane %v515, 0
    %v523 = vadd.f32 %v519, %v521
    %v524 = vpack.c.bf16 %v523, %v523
    %v525 = vld [vmem:[#allocation11] sm:$0xf]
    %v526 = vld [vmem:[#allocation11 + $0x4] sm:$0xf]
    %v527 = vld [vmem:[#allocation11 + $0x8] sm:$0xf]
    %v528 = vld [vmem:[#allocation11 + $0xc] sm:$0xf]
    %v529 = vld [vmem:[#allocation11 + $0x10] sm:$0xf]
    %v530 = vld [vmem:[#allocation11 + $0x14] sm:$0xf]
    %v531 = vld [vmem:[#allocation11 + $0x18] sm:$0xf]
    %v532 = vld [vmem:[#allocation11 + $0x1c] sm:$0xf]
    %v533 = vld [vmem:[#allocation11 + $0x20] sm:$0xf]
    %v534 = vld [vmem:[#allocation11 + $0x24] sm:$0xf]
    %v535 = vld [vmem:[#allocation11 + $0x28] sm:$0xf]
    %v536 = vld [vmem:[#allocation11 + $0x2c] sm:$0xf]
    %v537 = vld [vmem:[#allocation11 + $0x30] sm:$0xf]
    %v538 = vld [vmem:[#allocation11 + $0x34] sm:$0xf]
    %v539 = vld [vmem:[#allocation11 + $0x38] sm:$0xf]
    %v540 = vld [vmem:[#allocation11 + $0x3c] sm:$0xf]
    %v541 = vld [vmem:[%s12] sm:$0x1]
    %v543 = vperm.slane %v541, 0
    %v561 = vunpack.c.l.b16 %v525
    %v562 = vunpack.c.l.b16 %v526
    %v563 = vunpack.c.l.b16 %v527
    %v564 = vunpack.c.l.b16 %v528
    %v565 = vunpack.c.l.b16 %v529
    %v566 = vunpack.c.l.b16 %v530
    %v567 = vunpack.c.l.b16 %v531
    %v568 = vunpack.c.l.b16 %v532
    %v569 = vunpack.c.l.b16 %v533
    %v570 = vunpack.c.l.b16 %v534
    %v571 = vunpack.c.l.b16 %v535
    %v572 = vunpack.c.l.b16 %v536
    %v573 = vunpack.c.l.b16 %v537
    %v574 = vunpack.c.l.b16 %v538
    %v575 = vunpack.c.l.b16 %v539
    %v576 = vunpack.c.l.b16 %v540
    %v577 = vpack.c.b16 %v562, %v561
    %v578 = vpack.c.b16 %v564, %v563
    %v579 = vpack.c.b16 %v566, %v565
    %v580 = vpack.c.b16 %v568, %v567
    %v581 = vpack.c.b16 %v570, %v569
    %v582 = vpack.c.b16 %v572, %v571
    %v583 = vpack.c.b16 %v574, %v573
    %v584 = vpack.c.b16 %v576, %v575
    %593 = vmatpush.bf16.msra.mxu0 %v584
    %594 = vmatpush.bf16.msra.mxu0 %v583
    %595 = vmatpush.bf16.msra.mxu0 %v582
    %596 = vmatpush.bf16.msra.mxu0 %v581
    %597 = vmatpush.bf16.msra.mxu0 %v580
    %598 = vmatpush.bf16.msra.mxu0 %v579
    %599 = vmatpush.bf16.msra.mxu0 %v578
    %600 = vmatpush.bf16.msra.mxu0 %v577
    %601 = vmatmul.bf16.gmra.mxu0 %v524
    %v602 = vpop.f32.mrf.mxu0
    %v603 = vadd.f32 %v543, %v602
    %v604 = vpop.f32.mrf.mxu0
    %605 = vdwg.mxu0
    %v606 = vmul.f32 %v603, 0.2
    %v607 = vmax.f32 %v603, %v606
    %v608 = vrot.slane %v607, 4
    %v609 = vadd.f32 %v607, %v608
    %v610 = vrot.slane %v609, 2
    %v611 = vadd.f32 %v609, %v610
    %v612 = vrot.slane %v611, 1
    %v613 = vadd.f32 %v611, %v612
    %v614 = vmul.f32 %v613, %v365
    %v615 = vsub.f32 %v607, %v614
    %v616 = vmul.f32 %v615, %v615
    %v617 = vrot.slane %v616, 4
    %v618 = vadd.f32 %v616, %v617
    %v619 = vrot.slane %v618, 2
    %v620 = vadd.f32 %v618, %v619
    %v621 = vrot.slane %v620, 1
    %v622 = vadd.f32 %v620, %v621
    %v623 = vmul.f32 %v622, %v365
    %v624 = vld [vmem:[%s13] sm:$0x1]
    %v625 = vadd.f32 %v623, 1e-05
    %v626 = vrsqrt.pop %v625
    %v627 = vmul.f32 %v626, %v625
    %v628 = vmul.f32 %v627, %v626
    %v629 = vmul.f32 0.5, %v628
    %v630 = vsub.f32 1.5, %v629
    %v631 = vmul.f32 %v626, %v630
    %vm632 = vweird.f32 %v625
    %vm633 = vweird.f32 %v626
    %vm634 = vmor %vm632, %vm633
    %v635 = vsel %vm634, %v626, %v631
    %v636 = vmul.f32 %v624, %v635
    %v637 = vld [vmem:[%s14] sm:$0x1]
    %v638 = vmul.f32 %v636, %v614
    %v639 = vsub.f32 %v637, %v638
    %v641 = vperm.slane %v636, 0
    %v643 = vmul.f32 %v607, %v641
    %v645 = vperm.slane %v639, 0
    %v647 = vadd.f32 %v643, %v645
    %v648 = vpack.c.bf16 %v647, %v647
    %v649 = vld [vmem:[#allocation13] sm:$0xf]
    %v650 = vld [vmem:[#allocation13 + $0x4] sm:$0xf]
    %v651 = vld [vmem:[#allocation13 + $0x8] sm:$0xf]
    %v652 = vld [vmem:[#allocation13 + $0xc] sm:$0xf]
    %v653 = vld [vmem:[#allocation13 + $0x10] sm:$0xf]
    %v654 = vld [vmem:[#allocation13 + $0x14] sm:$0xf]
    %v655 = vld [vmem:[#allocation13 + $0x18] sm:$0xf]
    %v656 = vld [vmem:[#allocation13 + $0x1c] sm:$0xf]
    %v657 = vld [vmem:[#allocation13 + $0x20] sm:$0xf]
    %v658 = vld [vmem:[#allocation13 + $0x24] sm:$0xf]
    %v659 = vld [vmem:[#allocation13 + $0x28] sm:$0xf]
    %v660 = vld [vmem:[#allocation13 + $0x2c] sm:$0xf]
    %v661 = vld [vmem:[#allocation13 + $0x30] sm:$0xf]
    %v662 = vld [vmem:[#allocation13 + $0x34] sm:$0xf]
    %v663 = vld [vmem:[#allocation13 + $0x38] sm:$0xf]
    %v664 = vld [vmem:[#allocation13 + $0x3c] sm:$0xf]
    %v665 = vld [vmem:[%s16] sm:$0x1]
    %v667 = vperm.slane %v665, 0
    %v685 = vunpack.c.l.b16 %v649
    %v686 = vunpack.c.l.b16 %v650
    %v687 = vunpack.c.l.b16 %v651
    %v688 = vunpack.c.l.b16 %v652
    %v689 = vunpack.c.l.b16 %v653
    %v690 = vunpack.c.l.b16 %v654
    %v691 = vunpack.c.l.b16 %v655
    %v692 = vunpack.c.l.b16 %v656
    %v693 = vunpack.c.l.b16 %v657
    %v694 = vunpack.c.l.b16 %v658
    %v695 = vunpack.c.l.b16 %v659
    %v696 = vunpack.c.l.b16 %v660
    %v697 = vunpack.c.l.b16 %v661
    %v698 = vunpack.c.l.b16 %v662
    %v699 = vunpack.c.l.b16 %v663
    %v700 = vunpack.c.l.b16 %v664
    %v701 = vpack.c.b16 %v686, %v685
    %v702 = vpack.c.b16 %v688, %v687
    %v703 = vpack.c.b16 %v690, %v689
    %v704 = vpack.c.b16 %v692, %v691
    %v705 = vpack.c.b16 %v694, %v693
    %v706 = vpack.c.b16 %v696, %v695
    %v707 = vpack.c.b16 %v698, %v697
    %v708 = vpack.c.b16 %v700, %v699
    %717 = vmatpush.bf16.msra.mxu0 %v708
    %718 = vmatpush.bf16.msra.mxu0 %v707
    %719 = vmatpush.bf16.msra.mxu0 %v706
    %720 = vmatpush.bf16.msra.mxu0 %v705
    %721 = vmatpush.bf16.msra.mxu0 %v704
    %722 = vmatpush.bf16.msra.mxu0 %v703
    %723 = vmatpush.bf16.msra.mxu0 %v702
    %724 = vmatpush.bf16.msra.mxu0 %v701
    %725 = vmatmul.bf16.gmra.mxu0 %v648
    %v726 = vpop.f32.mrf.mxu0
    %v727 = vadd.f32 %v667, %v726
    %v728 = vpop.f32.mrf.mxu0
    %729 = vdwg.mxu0
    %v730 = vadd.f32 %v647, %v727
    %v731 = vpack.c.bf16 %v730, %v730
    %v732 = vld [vmem:[#allocation14] sm:$0xf]
    %v733 = vld [vmem:[#allocation14 + $0x4] sm:$0xf]
    %v734 = vld [vmem:[#allocation14 + $0x8] sm:$0xf]
    %v735 = vld [vmem:[#allocation14 + $0xc] sm:$0xf]
    %v736 = vld [vmem:[#allocation14 + $0x10] sm:$0xf]
    %v737 = vld [vmem:[#allocation14 + $0x14] sm:$0xf]
    %v738 = vld [vmem:[#allocation14 + $0x18] sm:$0xf]
    %v739 = vld [vmem:[#allocation14 + $0x1c] sm:$0xf]
    %v740 = vld [vmem:[#allocation14 + $0x20] sm:$0xf]
    %v741 = vld [vmem:[#allocation14 + $0x24] sm:$0xf]
    %v742 = vld [vmem:[#allocation14 + $0x28] sm:$0xf]
    %v743 = vld [vmem:[#allocation14 + $0x2c] sm:$0xf]
    %v744 = vld [vmem:[#allocation14 + $0x30] sm:$0xf]
    %v745 = vld [vmem:[#allocation14 + $0x34] sm:$0xf]
    %v746 = vld [vmem:[#allocation14 + $0x38] sm:$0xf]
    %v747 = vld [vmem:[#allocation14 + $0x3c] sm:$0xf]
    %v748 = vld [vmem:[%s18] sm:$0x1]
    %v750 = vperm.slane %v748, 0
    %v768 = vunpack.c.l.b16 %v732
    %v769 = vunpack.c.l.b16 %v733
    %v770 = vunpack.c.l.b16 %v734
    %v771 = vunpack.c.l.b16 %v735
    %v772 = vunpack.c.l.b16 %v736
    %v773 = vunpack.c.l.b16 %v737
    %v774 = vunpack.c.l.b16 %v738
    %v775 = vunpack.c.l.b16 %v739
    %v776 = vunpack.c.l.b16 %v740
    %v777 = vunpack.c.l.b16 %v741
    %v778 = vunpack.c.l.b16 %v742
    %v779 = vunpack.c.l.b16 %v743
    %v780 = vunpack.c.l.b16 %v744
    %v781 = vunpack.c.l.b16 %v745
    %v782 = vunpack.c.l.b16 %v746
    %v783 = vunpack.c.l.b16 %v747
    %v784 = vpack.c.b16 %v769, %v768
    %v785 = vpack.c.b16 %v771, %v770
    %v786 = vpack.c.b16 %v773, %v772
    %v787 = vpack.c.b16 %v775, %v774
    %v788 = vpack.c.b16 %v777, %v776
    %v789 = vpack.c.b16 %v779, %v778
    %v790 = vpack.c.b16 %v781, %v780
    %v791 = vpack.c.b16 %v783, %v782
    %800 = vmatpush.bf16.msra.mxu0 %v791
    %801 = vmatpush.bf16.msra.mxu0 %v790
    %802 = vmatpush.bf16.msra.mxu0 %v789
    %803 = vmatpush.bf16.msra.mxu0 %v788
    %804 = vmatpush.bf16.msra.mxu0 %v787
    %805 = vmatpush.bf16.msra.mxu0 %v786
    %806 = vmatpush.bf16.msra.mxu0 %v785
    %807 = vmatpush.bf16.msra.mxu0 %v784
    %808 = vmatmul.bf16.gmra.mxu0 %v731
    %v809 = vpop.f32.mrf.mxu0
    %v810 = vadd.f32 %v750, %v809
    %v811 = vpop.f32.mrf.mxu0
    %812 = vdwg.mxu0
    %v813 = vtanh.pop %v810
    %v814 = vpack.c.bf16 %v813, %v813
    %815 = vst [vmem:[#allocation16] sm:$0xf] %v814
    // Predicated region
    $region110: #{tpu_custom_call.1} parent=1 // pred_check
      _
    $region111: #{tpu_custom_call.1} parent=1 // pred_check_branch
      %817 = sbr.rel (0) target = $region113
    $region112: #{tpu_custom_call.1} parent=1 // pred_region
      %819 = vsyncadd [#allocation4], 0
      %s821 = sshll.u32 [#allocation16], 4
      %s822 = int_to_ptr.vmem [resolvable:$true] %s821
      %s823 = sshll.u32 %s19, 4
      %s824 = int_to_ptr.hbm [resolvable:$true] %s823
      %826 = dma.vmem_to_hbm [thread:$0]  %s822, 64, %s824, [#allocation4]
    $region113: #{tpu_custom_call.1} parent=1 // pred_fallthru
      _
    // Predicated region
    $region114: #{tpu_custom_call.1} parent=1 // pred_check
      _
    $region115: #{tpu_custom_call.1} parent=1 // pred_check_branch
      %828 = sbr.rel (0) target = $region117
    $region116: #{tpu_custom_call.1} parent=1 // pred_region
      %830 = dma.done [#allocation4], 64
    $region117: #{tpu_custom_call.1} parent=1 // pred_fallthru
      _
    %831 = vsyncpa [#allocation3], 1
    %832 = vsyncpa [#allocation6], 1
    %833 = vsyncpa [#allocation9], 1
    %834 = vsyncpa [#allocation12], 1
    %835 = vsyncpa [#allocation15], 1
    %836 = vsyncpa [#allocation4], 1

</llo_original>
